<compile_context>
chip_gen: v7x
topology: tpu7x:2x2x1
jax: 0.10.0
libtpu: 0.0.40
codegen_flags: <defaults>
</compile_context>

<pallas_src>
import jax
import jax.numpy as jnp
from jax.experimental import pallas as pl
from jax.experimental.pallas import tpu as pltpu

_EPS = 1e-5


def _round_up(v, m):
    return ((v + m - 1) // m) * m


# -----------------------------------------------------------------------------
# Kernel factories (closure constants: C = normalized size, G = rows per lane row)
# -----------------------------------------------------------------------------
def _make_kernel(c_norm, g):
    inv_c = 1.0 / float(c_norm)

    if g == 1:
        # Unpacked path (C >= 128 or packing not applicable): plain row reduce.
        def kernel(x_ref, w_ref, o_ref):
            x = x_ref[...].astype(jnp.float32)                    # (TR, C)
            s1 = jnp.sum(x, axis=-1, keepdims=True)               # (TR, 1)
            s2 = jnp.sum(x * x, axis=-1, keepdims=True)           # (TR, 1)
            mean = s1 * inv_c
            var = s2 * inv_c - mean * mean                        # ddof=0
            inv = jax.lax.rsqrt(var + _EPS)                       # EUP
            w = w_ref[...].astype(jnp.float32)                    # (1, C)
            o_ref[...] = (x * inv * w).astype(o_ref.dtype)

        return kernel

    # Packed path: each tile row holds G independent segments of length C.
    # seg  : (G*C, G) one-hot segment matrix, seg[j, s] = (j // C == s)
    # segt : (G, G*C) its transpose (precomputed in the wrapper)
    def kernel(x_ref, w_ref, seg_ref, segt_ref, o_ref):
        x = x_ref[...].astype(jnp.float32)                        # (TR, G*C)
        seg = seg_ref[...]                                        # (G*C, G) f32
        s1 = jnp.dot(x, seg, preferred_element_type=jnp.float32)  # (TR, G)  MXU
        s2 = jnp.dot(x * x, seg, preferred_element_type=jnp.float32)
        mean = s1 * inv_c
        var = s2 * inv_c - mean * mean                            # ddof=0
        inv = jax.lax.rsqrt(var + _EPS)                           # (TR, G)  EUP
        # Broadcast each segment's rsqrt back across its C lanes (MXU again).
        inv_b = jnp.dot(inv, segt_ref[...],
                        preferred_element_type=jnp.float32)       # (TR, G*C)
        w = w_ref[...].astype(jnp.float32)                        # (1, G*C), pre-tiled
        o_ref[...] = (x * inv_b * w).astype(o_ref.dtype)

    return kernel


# -----------------------------------------------------------------------------
# Wrapper
# -----------------------------------------------------------------------------
def biasfree_layernorm(x, weight, *, target_tile_bytes=2 * 1024 * 1024):
    """x: (..., C), weight: (C,). Returns same shape/dtype as x."""
    orig_shape = x.shape
    C = orig_shape[-1]
    assert weight.shape == (C,), weight.shape

    x2 = x.reshape(-1, C)                                         # layout glue only
    N = x2.shape[0]

    # Lane packing: put G = 128 // C rows in one lane-dense row when C < 128.
    G = 128 // C if (C < 128 and 128 // C >= 2) else 1
    if G > 1 and N % G != 0:
        # TODO(synk): pad N up to a multiple of G and slice back instead of
        # falling back to the lane-sparse path.
        G = 1
    W = G * C
    Np = N // G

    if G > 1:
        x_in = x2.reshape(Np, W)                                  # free contiguous view
        w_in = jnp.tile(weight, G).reshape(1, W)
    else:
        x_in = x2
        w_in = weight.reshape(1, W)

    # Byte-targeted row tile: ~target_tile_bytes per input tile, sublane-aligned.
    itemsize = jnp.dtype(x.dtype).itemsize
    br = target_tile_bytes // max(1, W * itemsize)
    br = max(8, (br // 8) * 8)
    # Prefer at least 2 grid steps so both v7x TensorCores get work.
    half_rows = max(8, _round_up(-(-Np // 2), 8))
    br = min(br, half_rows)
    grid = (pl.cdiv(Np, br),)

    cost = pl.CostEstimate(
        flops=8 * N * C,
        transcendentals=N,
        bytes_accessed=2 * N * C * itemsize + C * jnp.dtype(weight.dtype).itemsize,
    )
    cparams = pltpu.CompilerParams(
        dimension_semantics=("parallel",),
        vmem_limit_bytes=32 * 1024 * 1024,   # above v5e's 16 MiB default scoped VMEM
    )

    kernel = _make_kernel(C, G)
    x_spec = pl.BlockSpec((br, W), lambda i: (i, 0))
    w_spec = pl.BlockSpec((1, W), lambda i: (0, 0))
    o_spec = pl.BlockSpec((br, W), lambda i: (i, 0))

    if G > 1:
        seg = (jnp.arange(W)[:, None] // C == jnp.arange(G)[None, :]).astype(jnp.float32)
        seg_t = seg.T
        in_specs = [x_spec, w_spec,
                    pl.BlockSpec((W, G), lambda i: (0, 0)),
                    pl.BlockSpec((G, W), lambda i: (0, 0))]
        args = (x_in, w_in, seg, seg_t)
    else:
        in_specs = [x_spec, w_spec]
        args = (x_in, w_in)

    out = pl.pallas_call(
        kernel,
        out_shape=jax.ShapeDtypeStruct((Np, W), x.dtype),
        grid=grid,
        in_specs=in_specs,
        out_specs=o_spec,
        compiler_params=cparams,
        cost_estimate=cost,
    )(*args)

    return out.reshape(orig_shape)


biasfree_layernorm_jit = jax.jit(
    biasfree_layernorm, static_argnames=("target_tile_bytes",))


# -----------------------------------------------------------------------------
# Pure-JAX reference mirroring the PyTorch forward.
# -----------------------------------------------------------------------------
def _reference(x, weight):
    sigma = jnp.var(x, axis=-1, keepdims=True)                    # ddof=0 == unbiased=False
    return x / jnp.sqrt(sigma + _EPS) * weight


if __name__ == "__main__":
    key = jax.random.PRNGKey(0)

    # (shape, description) — small shapes consistent with how the module is used
    # in Restormer: tokens = flattened spatial positions, channels last.
    cases = [
        ((2, 64, 32), "packed path  (C=32 -> G=4, lane-dense 128-wide rows)"),
        ((2, 8, 128), "wide path    (C=128, no packing needed)"),
        ((2, 60, 32), "ragged grid  (30 packed rows -> 16 + 14 masked final block)"),
    ]

    ok = True
    for idx, (shape, _desc) in enumerate(cases):
        kx, kw, key = jax.random.split(key, 3)
        C = shape[-1]
        x = jax.random.normal(kx, shape, jnp.float32)
        # Module initializes weight to ones; use a non-trivial weight to
        # exercise the scaling path.
        weight = 1.0 + 0.1 * jax.random.normal(kw, (C,), jnp.float32)

        out = biasfree_layernorm_jit(x, weight)
        out = jax.block_until_ready(out)
        assert out.shape == x.shape, (idx, out.shape, x.shape)

        ref = _reference(x, weight)
        max_err = float(jnp.max(jnp.abs(out - ref)))
        if not jnp.allclose(out, ref, rtol=1e-4, atol=1e-4):
            ok = False
            print(f"case {idx} FAILED: max_err={max_err}")

    if ok:
        print("KERNEL_OK")
</pallas_src>

<mosaic_0001>
module attributes {stable_mosaic.version = 11 : i64} {
  func.func @kernel(%arg0: i32, %arg1: memref<16x128xf32, #tpu.memory_space<vmem>>, %arg2: memref<1x128xf32, #tpu.memory_space<vmem>>, %arg3: memref<128x4xf32, #tpu.memory_space<vmem>>, %arg4: memref<4x128xf32, #tpu.memory_space<vmem>>, %arg5: memref<16x128xf32, #tpu.memory_space<vmem>>) attributes {dimension_semantics = [#tpu.dimension_semantics<parallel>], iteration_bounds = array<i64: 2>, scalar_prefetch = 0 : i64, scratch_operands = 0 : i64, tpu.core_type = #tpu.core_type<tc>, window_params = [{transform_indices = @transform_0, window_bounds = array<i64: 16, 128>}, {pipeline_mode = #tpu.pipeline_mode<synchronous>, transform_indices = @transform_1, window_bounds = array<i64: 1, 128>}, {pipeline_mode = #tpu.pipeline_mode<synchronous>, transform_indices = @transform_2, window_bounds = array<i64: 128, 4>}, {pipeline_mode = #tpu.pipeline_mode<synchronous>, transform_indices = @transform_3, window_bounds = array<i64: 4, 128>}, {transform_indices = @transform_4, window_bounds = array<i64: 16, 128>}]} {
    %c0 = arith.constant 0 : index
    %c0_0 = arith.constant 0 : index
    %0 = vector.load %arg1[%c0, %c0_0] : memref<16x128xf32, #tpu.memory_space<vmem>>, vector<16x128xf32>
    %c0_1 = arith.constant 0 : index
    %c0_2 = arith.constant 0 : index
    %1 = vector.load %arg3[%c0_1, %c0_2] : memref<128x4xf32, #tpu.memory_space<vmem>>, vector<128x4xf32>
    %cst = arith.constant dense<0.000000e+00> : vector<16x4xf32>
    %2 = tpu.matmul %0, %1, %cst {dimension_numbers = #tpu.dot_dimension_numbers<[1], [0], [0], [1], [0, 0, 1, 1], [], []>} : vector<16x128xf32>, vector<128x4xf32>, vector<16x4xf32> -> vector<16x4xf32>
    %3 = arith.mulf %0, %0 : vector<16x128xf32>
    %cst_3 = arith.constant dense<0.000000e+00> : vector<16x4xf32>
    %4 = tpu.matmul %3, %1, %cst_3 {dimension_numbers = #tpu.dot_dimension_numbers<[1], [0], [0], [1], [0, 0, 1, 1], [], []>} : vector<16x128xf32>, vector<128x4xf32>, vector<16x4xf32> -> vector<16x4xf32>
    %cst_4 = arith.constant 3.125000e-02 : f32
    %5 = vector.broadcast %cst_4 : f32 to vector<16x4xf32>
    %6 = arith.mulf %2, %5 : vector<16x4xf32>
    %cst_5 = arith.constant 3.125000e-02 : f32
    %7 = vector.broadcast %cst_5 : f32 to vector<16x4xf32>
    %8 = arith.mulf %4, %7 : vector<16x4xf32>
    %9 = arith.mulf %6, %6 : vector<16x4xf32>
    %10 = arith.subf %8, %9 : vector<16x4xf32>
    %cst_6 = arith.constant 9.99999974E-6 : f32
    %11 = vector.broadcast %cst_6 : f32 to vector<16x4xf32>
    %12 = arith.addf %10, %11 : vector<16x4xf32>
    %13 = math.rsqrt %12 : vector<16x4xf32>
    %c0_7 = arith.constant 0 : index
    %c0_8 = arith.constant 0 : index
    %14 = vector.load %arg4[%c0_7, %c0_8] : memref<4x128xf32, #tpu.memory_space<vmem>>, vector<4x128xf32>
    %cst_9 = arith.constant dense<0.000000e+00> : vector<16x128xf32>
    %15 = tpu.matmul %13, %14, %cst_9 {dimension_numbers = #tpu.dot_dimension_numbers<[1], [0], [0], [1], [0, 0, 1, 1], [], []>} : vector<16x4xf32>, vector<4x128xf32>, vector<16x128xf32> -> vector<16x128xf32>
    %c0_10 = arith.constant 0 : index
    %c0_11 = arith.constant 0 : index
    %16 = vector.load %arg2[%c0_10, %c0_11] : memref<1x128xf32, #tpu.memory_space<vmem>>, vector<1x128xf32>
    %17 = arith.mulf %0, %15 : vector<16x128xf32>
    %18 = vector.broadcast %16 : vector<1x128xf32> to vector<16x128xf32>
    %19 = arith.mulf %17, %18 : vector<16x128xf32>
    %c0_12 = arith.constant 0 : index
    %c0_13 = arith.constant 0 : index
    %20 = vector.load %arg5[%c0_12, %c0_13] : memref<16x128xf32, #tpu.memory_space<vmem>>, vector<16x128xf32>
    tpu.vector_store %arg5[%c0_12, %c0_13], %19 {strides = array<i32>} : memref<16x128xf32, #tpu.memory_space<vmem>>, vector<16x128xf32>,
    return
  }
  func.func @transform_0(%arg0: i32) -> (i32, i32) {
    %c0_i32 = arith.constant 0 : i32
    %c0_i32_0 = arith.constant 0 : i32
    return %arg0, %c0_i32 : i32, i32
  }
  func.func @transform_1(%arg0: i32) -> (i32, i32) {
    %c0_i32 = arith.constant 0 : i32
    %c0_i32_0 = arith.constant 0 : i32
    %c0_i32_1 = arith.constant 0 : i32
    return %c0_i32, %c0_i32_0 : i32, i32
  }
  func.func @transform_2(%arg0: i32) -> (i32, i32) {
    %c0_i32 = arith.constant 0 : i32
    %c0_i32_0 = arith.constant 0 : i32
    %c0_i32_1 = arith.constant 0 : i32
    return %c0_i32, %c0_i32_0 : i32, i32
  }
  func.func @transform_3(%arg0: i32) -> (i32, i32) {
    %c0_i32 = arith.constant 0 : i32
    %c0_i32_0 = arith.constant 0 : i32
    %c0_i32_1 = arith.constant 0 : i32
    return %c0_i32, %c0_i32_0 : i32, i32
  }
  func.func @transform_4(%arg0: i32) -> (i32, i32) {
    %c0_i32 = arith.constant 0 : i32
    %c0_i32_0 = arith.constant 0 : i32
    return %arg0, %c0_i32 : i32, i32
  }
}

</mosaic_0001>

<llo_original>
// kernel: tile.9
$region0: #{tile.9}
  %s0 = inlined_call_operand.vmem [shape: f32[4,32], index: 0, kind: input, shape index: {}]
  %s1 = inlined_call_operand.vmem [shape: f32[1,128], index: 1, kind: output, shape index: {}]
  $region1: #{tile.9} parent=0
    #allocation0 [shape = 'u8[4096]{0}', space=vmem, size = 0x1000, scoped, tag = 'scoped mem for output reshape']
    #allocation1 [shape = 'u8[4096]{0}', space=vmem, size = 0x1000, scoped, tag = 'scoped mem for input reshape']
    %s3 = sshllo.u32 0, 4
    %v4 = vld [vmem:[%s0] sm:%s3]
    %5 = vst [vmem:[#allocation1] sm:%s3] %v4
    %v6 = vld [vmem:[#allocation1] sm:$0x1]
    %vm7 = vcmask 261120
    %8 = vst.msk [vmem:[#allocation0] sm:$0x1] %vm7, %v6
    %s9 = scalar_lea.vmem [#allocation1], 3
    %v10 = vld [vmem:[%s9] sm:$0x1]
    %11 = vrot.lane.b32.xlu0 %v10, 96
    %v12 = vpop.permute.xlu0 %11
    %vm13 = vcmask 1048320
    %14 = vst.msk [vmem:[#allocation0] sm:$0x1] %vm13, %v12
    %s15 = scalar_lea.vmem [#allocation1], 2
    %v16 = vld [vmem:[%s15] sm:$0x1]
    %17 = vrot.lane.b32.xlu0 %v16, 64
    %v18 = vpop.permute.xlu0 %17
    %vm19 = vcmask 785920
    %20 = vst.msk [vmem:[#allocation0] sm:$0x1] %vm19, %v18
    %s21 = scalar_lea.vmem [#allocation1], 1
    %v22 = vld [vmem:[%s21] sm:$0x1]
    %23 = vrot.lane.b32.xlu0 %v22, 32
    %v24 = vpop.permute.xlu0 %23
    %vm25 = vcmask 523520
    %26 = vst.msk [vmem:[#allocation0] sm:$0x1] %vm25, %v24
    %s28 = sshllo.u32 0, 1
    %v30 = vld [vmem:[#allocation0] sm:%s28]
    %s31 = sshllo.u32 0, 1
    %32 = vst [vmem:[%s1] sm:%s31] %v30

// kernel: tile.8
$region0: #{tile.8}
  #allocation0 [shape = 's32[1]{0}', space=sflag, size = 0x4, scoped, tag = 'scoped memory for tile.8']
  %s0 = inlined_call_operand.vmem [shape: f32[32], index: 0, kind: input, shape index: {}]
  %s1 = inlined_call_operand.vmem [shape: f32[4,32], index: 1, kind: output, shape index: {}]
  // Predicated region
  $region2: #{tile.8} parent=0 // pred_check
    _
  $region3: #{tile.8} parent=0 // pred_check_branch
    %3 = sbr.rel (0) target = $region5
  $region4: #{tile.8} parent=0 // pred_region
    _
  $region5: #{tile.8} parent=0 // pred_fallthru
    _
  %v4 = vld [vmem:[%s0] ss:$0 sm:$0xff]
  %5 = vst [vmem:[%s1] sm:$0xf] %v4

// kernel: biasfree_layernorm.1
$region0: #{biasfree_layernorm.1}
  #allocation0 [shape = 'u32[]', space=smem, size = 0x4, offset = 0x4, fixed_abs, tag = 'smem constant byte address 0x4 - core index']
  #allocation1 [shape = 'u32[144,128]{1,0:T(1,128)}', space=vmem, size = 0x12000, scoped, tag = 'internal scratch']
  %s0 = inlined_call_operand.vmem [shape: f32[32,128], index: 0, kind: input, shape index: {}]
  %s1 = inlined_call_operand.vmem [shape: f32[1,128], index: 1, kind: input, shape index: {}]
  %s2 = inlined_call_operand.vmem [shape: f32[128,4], index: 2, kind: input, shape index: {}]
  %s3 = inlined_call_operand.vmem [shape: f32[4,128], index: 3, kind: input, shape index: {}]
  %s4 = inlined_call_operand.vmem [shape: f32[32,128], index: 4, kind: output, shape index: {}]
  %s5 = sld [smem:[#allocation0]]
  $region49: #{biasfree_layernorm.1} parent=0
    _
  %s7 = ssub.s32 1, %s5
  %s8 = scalar_select 0, %s7, %s5
  loop: start=0, step=1, limit=4
  $region2: #{biasfree_layernorm.1} parent=0 // loop_pre_header
    _
  $region3: #{biasfree_layernorm.1} parent=0 // loop_header
    %s10 = sphi 0, %s14
    %p11 = scmp.ge.s32.totalorder %s10, 4
    %s20 = sphi 0, %s22
    %s23 = sphi 0, %s20
    %s24 = sphi 0, %s23
    %s40 = sphi 0, %s24
    %s44 = sphi 0, %s44
    %s46 = sphi 0, %s44
    %s47 = sphi 0, %s46
    %s61 = sphi 0, %s47
    %s65 = sphi 0, %s65
    %s67 = sphi 0, %s65
    %s68 = sphi 0, %s67
    %s82 = sphi 0, %s68
    %s86 = sphi 0, %s86
    %s88 = sphi 0, %s86
    %s89 = sphi 0, %s88
    %s103 = sphi 0, %s89
    %s109 = sphi 0, %s111
    %s112 = sphi 0, %s109
    %s113 = sphi 0, %s112
    %s129 = sphi 0, %s113
  $region4: #{biasfree_layernorm.1} parent=0 // loop_header_branch
    %13 = sbr.rel (%p11) target = $region8
  $region5: #{biasfree_layernorm.1} parent=0 // loop_body
    %s15 = ssub.s32 %s10, 1
    %s16 = ssub.s32 %s10, 2
    %s17 = sadd.s32 %s10, 1
    %s18 = ssub.s32 %s10, %s17
    %p19 = scmp.eq.s32.totalorder %s18, 0
    %s21 = sadd.s32 %s20, 1
    %s22 = scalar_select %p19, %s20, %s21
    %p25 = pneg %p19
    %p26 = scmp.eq.s32.totalorder %s10, 1
    %p27 = por %p25, %p26
    %p28 = scmp.ne.s32.totalorder %s20, %s23
    %p29 = scmp.eq.s32.totalorder %s10, 0
    %p30 = por %p28, %p29
    %p31 = scmp.ne.s32.totalorder %s20, %s23
    %p32 = scmp.eq.s32.totalorder %s15, 1
    %p33 = por %p31, %p32
    %p34 = scmp.ne.s32.totalorder %s23, %s24
    %p35 = scmp.eq.s32.totalorder %s15, 0
    %p36 = por %p34, %p35
    %p37 = scmp.ne.s32.totalorder %s23, %s24
    %p38 = scmp.eq.s32.totalorder %s16, 1
    %p39 = por %p37, %p38
    %p41 = scmp.ne.s32.totalorder %s24, %s40
    %p42 = scmp.eq.s32.totalorder %s16, 0
    %p43 = por %p41, %p42
    %s45 = sadd.s32 %s44, 1
    %p48 = scmp.eq.s32.totalorder %s10, 1
    %p49 = scmp.ne.s32.totalorder %s44, %s46
    %p50 = scmp.eq.s32.totalorder %s10, 0
    %p51 = por %p49, %p50
    %p52 = scmp.ne.s32.totalorder %s44, %s46
    %p53 = scmp.eq.s32.totalorder %s15, 1
    %p54 = por %p52, %p53
    %p55 = scmp.ne.s32.totalorder %s46, %s47
    %p56 = scmp.eq.s32.totalorder %s15, 0
    %p57 = por %p55, %p56
    %p58 = scmp.ne.s32.totalorder %s46, %s47
    %p59 = scmp.eq.s32.totalorder %s16, 1
    %p60 = por %p58, %p59
    %p62 = scmp.ne.s32.totalorder %s47, %s61
    %p63 = scmp.eq.s32.totalorder %s16, 0
    %p64 = por %p62, %p63
    %s66 = sadd.s32 %s65, 1
    %p69 = scmp.eq.s32.totalorder %s10, 1
    %p70 = scmp.ne.s32.totalorder %s65, %s67
    %p71 = scmp.eq.s32.totalorder %s10, 0
    %p72 = por %p70, %p71
    %p73 = scmp.ne.s32.totalorder %s65, %s67
    %p74 = scmp.eq.s32.totalorder %s15, 1
    %p75 = por %p73, %p74
    %p76 = scmp.ne.s32.totalorder %s67, %s68
    %p77 = scmp.eq.s32.totalorder %s15, 0
    %p78 = por %p76, %p77
    %p79 = scmp.ne.s32.totalorder %s67, %s68
    %p80 = scmp.eq.s32.totalorder %s16, 1
    %p81 = por %p79, %p80
    %p83 = scmp.ne.s32.totalorder %s68, %s82
    %p84 = scmp.eq.s32.totalorder %s16, 0
    %p85 = por %p83, %p84
    %s87 = sadd.s32 %s86, 1
    %p90 = scmp.eq.s32.totalorder %s10, 1
    %p91 = scmp.ne.s32.totalorder %s86, %s88
    %p92 = scmp.eq.s32.totalorder %s10, 0
    %p93 = por %p91, %p92
    %p94 = scmp.ne.s32.totalorder %s86, %s88
    %p95 = scmp.eq.s32.totalorder %s15, 1
    %p96 = por %p94, %p95
    %p97 = scmp.ne.s32.totalorder %s88, %s89
    %p98 = scmp.eq.s32.totalorder %s15, 0
    %p99 = por %p97, %p98
    %p100 = scmp.ne.s32.totalorder %s88, %s89
    %p101 = scmp.eq.s32.totalorder %s16, 1
    %p102 = por %p100, %p101
    %p104 = scmp.ne.s32.totalorder %s89, %s103
    %p105 = scmp.eq.s32.totalorder %s16, 0
    %p106 = por %p104, %p105
    %s107 = ssub.s32 %s10, %s17
    %p108 = scmp.eq.s32.totalorder %s107, 0
    %s110 = sadd.s32 %s109, 1
    %s111 = scalar_select %p108, %s109, %s110
    %p114 = pneg %p108
    %p115 = scmp.eq.s32.totalorder %s10, 1
    %p116 = por %p114, %p115
    %p117 = scmp.ne.s32.totalorder %s109, %s112
    %p118 = scmp.eq.s32.totalorder %s10, 0
    %p119 = por %p117, %p118
    %p120 = scmp.ne.s32.totalorder %s109, %s112
    %p121 = scmp.eq.s32.totalorder %s15, 1
    %p122 = por %p120, %p121
    %p123 = scmp.ne.s32.totalorder %s112, %s113
    %p124 = scmp.eq.s32.totalorder %s15, 0
    %p125 = por %p123, %p124
    %p126 = scmp.ne.s32.totalorder %s112, %s113
    %p127 = scmp.eq.s32.totalorder %s16, 1
    %p128 = por %p126, %p127
    %p130 = scmp.ne.s32.totalorder %s113, %s129
    %p131 = scmp.eq.s32.totalorder %s16, 0
    %p132 = por %p130, %p131
    %p133 = scmp.le.s32.totalorder 1, %s10
    %p134 = scmp.lt.s32.totalorder %s10, 3
    %p135 = pnand %p133, %p134
    %p136 = pneg %p135
    // Predicated region
    $region9: #{biasfree_layernorm.1} parent=5 // pred_check
      _
    $region10: #{biasfree_layernorm.1} parent=5 // pred_check_branch
      %138 = sbr.rel (%p135) target = $region12
    $region11: #{biasfree_layernorm.1} parent=5 // pred_region
      %s139 = ssub.s32 %s10, 1
      // Predicated region
      $region13: #{biasfree_layernorm.1} parent=11 // pred_check
        %p140 = pneg %p57
      $region14: #{biasfree_layernorm.1} parent=11 // pred_check_branch
        %142 = sbr.rel (%p140) target = $region16
      $region15: #{biasfree_layernorm.1} parent=11 // pred_region
        _
      $region16: #{biasfree_layernorm.1} parent=11 // pred_fallthru
        _
      // Predicated region
      $region17: #{biasfree_layernorm.1} parent=11 // pred_check
        %p143 = pneg %p78
      $region18: #{biasfree_layernorm.1} parent=11 // pred_check_branch
        %145 = sbr.rel (%p143) target = $region20
      $region19: #{biasfree_layernorm.1} parent=11 // pred_region
        _
      $region20: #{biasfree_layernorm.1} parent=11 // pred_fallthru
        _
      // Predicated region
      $region21: #{biasfree_layernorm.1} parent=11 // pred_check
        %p146 = pneg %p99
      $region22: #{biasfree_layernorm.1} parent=11 // pred_check_branch
        %148 = sbr.rel (%p146) target = $region24
      $region23: #{biasfree_layernorm.1} parent=11 // pred_region
        _
      $region24: #{biasfree_layernorm.1} parent=11 // pred_fallthru
        _
    $region12: #{biasfree_layernorm.1} parent=5 // pred_fallthru
      _
    %p149 = scmp.lt.s32.totalorder %s10, 2
    // Predicated region
    $region25: #{biasfree_layernorm.1} parent=5 // pred_check
      %p150 = pneg %p149
    $region26: #{biasfree_layernorm.1} parent=5 // pred_check_branch
      %152 = sbr.rel (%p150) target = $region28
    $region27: #{biasfree_layernorm.1} parent=5 // pred_region
      // Predicated region
      $region29: #{biasfree_layernorm.1} parent=27 // pred_check
        %p153 = pneg %p30
      $region30: #{biasfree_layernorm.1} parent=27 // pred_check_branch
        %155 = sbr.rel (%p153) target = $region32
      $region31: #{biasfree_layernorm.1} parent=27 // pred_region
        %s156 = smul.u32 2, %s10
        %p157 = scmp.lt.s32.totalorder %s156, 3
        %s158 = scalar_select %p157, %s156, 3
        %s159 = smul.addr %s158, 8
        %s160 = scalar_lea.vmem %s0, %s159
        %s161 = smul.u32 2, %s10
      $region32: #{biasfree_layernorm.1} parent=27 // pred_fallthru
        _
    $region28: #{biasfree_layernorm.1} parent=5 // pred_fallthru
      _
    %p162 = scmp.le.s32.totalorder 1, %s10
    %p163 = scmp.lt.s32.totalorder %s10, 3
    %p164 = pnand %p162, %p163
    %p165 = pneg %p164
    // Predicated region
    $region33: #{biasfree_layernorm.1} parent=5 // pred_check
      _
    $region34: #{biasfree_layernorm.1} parent=5 // pred_check_branch
      %167 = sbr.rel (%p164) target = $region36
    $region35: #{biasfree_layernorm.1} parent=5 // pred_region
      %s168 = ssub.s32 %s10, 1
      %s169 = smul.u32 2, %s15
      %p170 = scmp.lt.s32.totalorder %s169, 3
      %s171 = scalar_select %p170, %s169, 3
      %s172 = smul.addr %s171, 8
      %s173 = scalar_lea.vmem %s0, %s172
      %p174 = pneg %p36
      %p175 = pneg %p33
      %p176 = pneg %p57
      %p177 = pneg %p54
      %p178 = pneg %p78
      %p179 = pneg %p75
      %p180 = pneg %p99
      %p181 = pneg %p96
      %p182 = pneg %p125
      %p183 = pneg %p122
      %s184 = smul.u32 2, %s15
      %p185 = scmp.lt.s32.totalorder %s184, 3
      %s186 = scalar_select %p185, %s184, 3
      %s187 = smul.addr %s186, 8
      %s188 = scalar_lea.vmem %s4, %s187
      %s189 = smul.u32 2, %s15
      %p190 = scmp.lt.s32.totalorder %s189, 3
      %s191 = scalar_select %p190, %s189, 3
      %s192 = smul.addr %s191, 8
      %s193 = scalar_lea.vmem %s0, %s192
      %s194 = smul.u32 2, %s15
      %s195 = smul.u32 2, %s15
      %p196 = scmp.lt.s32.totalorder %s195, 3
      %s197 = scalar_select %p196, %s195, 3
      %s198 = smul.addr %s197, 8
      %s199 = scalar_lea.vmem %s4, %s198
      %s200 = smul.u32 2, %s15
      %v201 = vld [vmem:[%s193] sm:$0xff]
      %v202 = vld [vmem:[%s193 + $0x8] sm:$0xff]
      %v203 = vld [vmem:[%s2] sm:$0xff]
      %v204 = vld [vmem:[%s2 + $0x8] sm:$0xff]
      %v205 = vld [vmem:[%s2 + $0x10] sm:$0xff]
      %v206 = vld [vmem:[%s2 + $0x18] sm:$0xff]
      %v207 = vld [vmem:[%s2 + $0x20] sm:$0xff]
      %v208 = vld [vmem:[%s2 + $0x28] sm:$0xff]
      %v209 = vld [vmem:[%s2 + $0x30] sm:$0xff]
      %v210 = vld [vmem:[%s2 + $0x38] sm:$0xff]
      %v211 = vld [vmem:[%s2 + $0x40] sm:$0xff]
      %v212 = vld [vmem:[%s2 + $0x48] sm:$0xff]
      %v213 = vld [vmem:[%s2 + $0x50] sm:$0xff]
      %v214 = vld [vmem:[%s2 + $0x58] sm:$0xff]
      %v215 = vld [vmem:[%s2 + $0x60] sm:$0xff]
      %v216 = vld [vmem:[%s2 + $0x68] sm:$0xff]
      %v217 = vld [vmem:[%s2 + $0x70] sm:$0xff]
      %v218 = vld [vmem:[%s2 + $0x78] sm:$0xff]
      %219 = vmatprep.subr.mxu0 0.0
      %220 = vmatpush1.msra.mxu0 %v203
      %221 = vmatprep.subr.mxu0 0.0
      %222 = vmatpush1.msra.mxu0 %v204
      %223 = vmatprep.subr.mxu0 0.0
      %224 = vmatpush1.msra.mxu0 %v205
      %225 = vmatprep.subr.mxu0 0.0
      %226 = vmatpush1.msra.mxu0 %v206
      %227 = vmatprep.subr.mxu0 0.0
      %228 = vmatpush1.msra.mxu0 %v207
      %229 = vmatprep.subr.mxu0 0.0
      %230 = vmatpush1.msra.mxu0 %v208
      %231 = vmatprep.subr.mxu0 0.0
      %232 = vmatpush1.msra.mxu0 %v209
      %233 = vmatprep.subr.mxu0 0.0
      %234 = vmatpush1.msra.mxu0 %v210
      %235 = vmatprep.subr.mxu0 0.0
      %236 = vmatpush1.msra.mxu0 %v211
      %237 = vmatprep.subr.mxu0 0.0
      %238 = vmatpush1.msra.mxu0 %v212
      %239 = vmatprep.subr.mxu0 0.0
      %240 = vmatpush1.msra.mxu0 %v213
      %241 = vmatprep.subr.mxu0 0.0
      %242 = vmatpush1.msra.mxu0 %v214
      %243 = vmatprep.subr.mxu0 0.0
      %244 = vmatpush1.msra.mxu0 %v215
      %245 = vmatprep.subr.mxu0 0.0
      %246 = vmatpush1.msra.mxu0 %v216
      %247 = vmatprep.subr.mxu0 0.0
      %248 = vmatpush1.msra.mxu0 %v217
      %249 = vmatprep.subr.mxu0 0.0
      %250 = vmatpush1.msra.mxu0 %v218
      %251 = vmatprep.subr.mxu0 0.0
      %252 = vmatpush1.msra.mxu0 0.0
      %253 = vmatprep.subr.mxu0 0.0
      %254 = vmatpush1.msra.mxu0 0.0
      %255 = vmatprep.subr.mxu0 0.0
      %256 = vmatpush1.msra.mxu0 0.0
      %257 = vmatprep.subr.mxu0 0.0
      %258 = vmatpush1.msra.mxu0 0.0
      %259 = vmatprep.subr.mxu0 0.0
      %260 = vmatpush1.msra.mxu0 0.0
      %261 = vmatprep.subr.mxu0 0.0
      %262 = vmatpush1.msra.mxu0 0.0
      %263 = vmatprep.subr.mxu0 0.0
      %264 = vmatpush1.msra.mxu0 0.0
      %265 = vmatprep.subr.mxu0 0.0
      %266 = vmatpush1.msra.mxu0 0.0
      %267 = vmatprep.subr.mxu0 0.0
      %268 = vmatpush1.msra.mxu0 0.0
      %269 = vmatprep.subr.mxu0 0.0
      %270 = vmatpush1.msra.mxu0 0.0
      %271 = vmatprep.subr.mxu0 0.0
      %272 = vmatpush1.msra.mxu0 0.0
      %273 = vmatprep.subr.mxu0 0.0
      %274 = vmatpush1.msra.mxu0 0.0
      %275 = vmatprep.subr.mxu0 0.0
      %276 = vmatpush1.msra.mxu0 0.0
      %277 = vmatprep.subr.mxu0 0.0
      %278 = vmatpush1.msra.mxu0 0.0
      %279 = vmatprep.subr.mxu0 0.0
      %280 = vmatpush1.msra.mxu0 0.0
      %281 = vmatprep.subr.mxu0 0.0
      %282 = vmatpush1.msra.mxu0 0.0
      %283 = vmatprep.mubr.f32.mxu0 0.0
      %284 = vmatmul.mubr.f32.gmra.mrb[0].mxu0 %v201
      %v285 = vpop.f32.mrb[0].mxu0
      %v286 = vadd.f32 0.0, %v285
      %v287 = vpop.f32.mrb[0].mxu0
      %288 = vmatprep.mubr.f32.mxu0 0.0
      %289 = vmatmul.mubr.f32.gmra.mrb[0].mxu0 %v202
      %v290 = vpop.f32.mrb[0].mxu0
      %v291 = vadd.f32 0.0, %v290
      %v292 = vpop.f32.mrb[0].mxu0
      %293 = vdwg.mxu0
      %v294 = vmul.f32 %v201, %v201
      %v295 = vmul.f32 %v202, %v202
      %296 = vmatprep.subr.mxu0 0.0
      %297 = vmatpush1.msra.mxu0 %v203
      %298 = vmatprep.subr.mxu0 0.0
      %299 = vmatpush1.msra.mxu0 %v204
      %300 = vmatprep.subr.mxu0 0.0
      %301 = vmatpush1.msra.mxu0 %v205
      %302 = vmatprep.subr.mxu0 0.0
      %303 = vmatpush1.msra.mxu0 %v206
      %304 = vmatprep.subr.mxu0 0.0
      %305 = vmatpush1.msra.mxu0 %v207
      %306 = vmatprep.subr.mxu0 0.0
      %307 = vmatpush1.msra.mxu0 %v208
      %308 = vmatprep.subr.mxu0 0.0
      %309 = vmatpush1.msra.mxu0 %v209
      %310 = vmatprep.subr.mxu0 0.0
      %311 = vmatpush1.msra.mxu0 %v210
      %312 = vmatprep.subr.mxu0 0.0
      %313 = vmatpush1.msra.mxu0 %v211
      %314 = vmatprep.subr.mxu0 0.0
      %315 = vmatpush1.msra.mxu0 %v212
      %316 = vmatprep.subr.mxu0 0.0
      %317 = vmatpush1.msra.mxu0 %v213
      %318 = vmatprep.subr.mxu0 0.0
      %319 = vmatpush1.msra.mxu0 %v214
      %320 = vmatprep.subr.mxu0 0.0
      %321 = vmatpush1.msra.mxu0 %v215
      %322 = vmatprep.subr.mxu0 0.0
      %323 = vmatpush1.msra.mxu0 %v216
      %324 = vmatprep.subr.mxu0 0.0
      %325 = vmatpush1.msra.mxu0 %v217
      %326 = vmatprep.subr.mxu0 0.0
      %327 = vmatpush1.msra.mxu0 %v218
      %328 = vmatprep.subr.mxu0 0.0
      %329 = vmatpush1.msra.mxu0 0.0
      %330 = vmatprep.subr.mxu0 0.0
      %331 = vmatpush1.msra.mxu0 0.0
      %332 = vmatprep.subr.mxu0 0.0
      %333 = vmatpush1.msra.mxu0 0.0
      %334 = vmatprep.subr.mxu0 0.0
      %335 = vmatpush1.msra.mxu0 0.0
      %336 = vmatprep.subr.mxu0 0.0
      %337 = vmatpush1.msra.mxu0 0.0
      %338 = vmatprep.subr.mxu0 0.0
      %339 = vmatpush1.msra.mxu0 0.0
      %340 = vmatprep.subr.mxu0 0.0
      %341 = vmatpush1.msra.mxu0 0.0
      %342 = vmatprep.subr.mxu0 0.0
      %343 = vmatpush1.msra.mxu0 0.0
      %344 = vmatprep.subr.mxu0 0.0
      %345 = vmatpush1.msra.mxu0 0.0
      %346 = vmatprep.subr.mxu0 0.0
      %347 = vmatpush1.msra.mxu0 0.0
      %348 = vmatprep.subr.mxu0 0.0
      %349 = vmatpush1.msra.mxu0 0.0
      %350 = vmatprep.subr.mxu0 0.0
      %351 = vmatpush1.msra.mxu0 0.0
      %352 = vmatprep.subr.mxu0 0.0
      %353 = vmatpush1.msra.mxu0 0.0
      %354 = vmatprep.subr.mxu0 0.0
      %355 = vmatpush1.msra.mxu0 0.0
      %356 = vmatprep.subr.mxu0 0.0
      %357 = vmatpush1.msra.mxu0 0.0
      %358 = vmatprep.subr.mxu0 0.0
      %359 = vmatpush1.msra.mxu0 0.0
      %360 = vmatprep.mubr.f32.mxu0 0.0
      %361 = vmatmul.mubr.f32.gmra.mrb[0].mxu0 %v294
      %v362 = vpop.f32.mrb[0].mxu0
      %v363 = vadd.f32 0.0, %v362
      %v364 = vpop.f32.mrb[0].mxu0
      %365 = vmatprep.mubr.f32.mxu0 0.0
      %366 = vmatmul.mubr.f32.gmra.mrb[0].mxu0 %v295
      %v367 = vpop.f32.mrb[0].mxu0
      %v368 = vadd.f32 0.0, %v367
      %v369 = vpop.f32.mrb[0].mxu0
      %370 = vdwg.mxu0
      %v371 = vmul.f32 %v286, 0.03125
      %v372 = vmul.f32 %v291, 0.03125
      %v373 = vmul.f32 %v363, 0.03125
      %v374 = vmul.f32 %v368, 0.03125
      %v375 = vmul.f32 %v371, %v371
      %v376 = vmul.f32 %v372, %v372
      %v377 = vsub.f32 %v373, %v375
      %v378 = vsub.f32 %v374, %v376
      %v379 = vadd.f32 %v377, 1e-05
      %v380 = vadd.f32 %v378, 1e-05
      %v381 = vrsqrt.pop %v379
      %v382 = vrsqrt.pop %v380
      %v383 = vld [vmem:[%s3] sm:$0xf]
      %vm384 = vcmask 31744
      %v386 = vsel %vm384, %v381, 0
      %v389 = vsel %vm384, %v382, 0
      %vm391 = vcmask 1043456
      %v393 = vsel %vm391, %v383, 0
      %395 = vmatprep.subr.mxu0 0.0
      %396 = vmatpush1.msra.mxu0 %v393
      %397 = vmatprep.subr.mxu0 0.0
      %398 = vmatpush1.msra.mxu0 0.0
      %399 = vmatprep.subr.mxu0 0.0
      %400 = vmatpush1.msra.mxu0 0.0
      %401 = vmatprep.subr.mxu0 0.0
      %402 = vmatpush1.msra.mxu0 0.0
      %403 = vmatprep.subr.mxu0 0.0
      %404 = vmatpush1.msra.mxu0 0.0
      %405 = vmatprep.subr.mxu0 0.0
      %406 = vmatpush1.msra.mxu0 0.0
      %407 = vmatprep.subr.mxu0 0.0
      %408 = vmatpush1.msra.mxu0 0.0
      %409 = vmatprep.subr.mxu0 0.0
      %410 = vmatpush1.msra.mxu0 0.0
      %411 = vmatprep.subr.mxu0 0.0
      %412 = vmatpush1.msra.mxu0 0.0
      %413 = vmatprep.subr.mxu0 0.0
      %414 = vmatpush1.msra.mxu0 0.0
      %415 = vmatprep.subr.mxu0 0.0
      %416 = vmatpush1.msra.mxu0 0.0
      %417 = vmatprep.subr.mxu0 0.0
      %418 = vmatpush1.msra.mxu0 0.0
      %419 = vmatprep.subr.mxu0 0.0
      %420 = vmatpush1.msra.mxu0 0.0
      %421 = vmatprep.subr.mxu0 0.0
      %422 = vmatpush1.msra.mxu0 0.0
      %423 = vmatprep.subr.mxu0 0.0
      %424 = vmatpush1.msra.mxu0 0.0
      %425 = vmatprep.subr.mxu0 0.0
      %426 = vmatpush1.msra.mxu0 0.0
      %427 = vmatprep.subr.mxu0 0.0
      %428 = vmatpush1.msra.mxu0 0.0
      %429 = vmatprep.subr.mxu0 0.0
      %430 = vmatpush1.msra.mxu0 0.0
      %431 = vmatprep.subr.mxu0 0.0
      %432 = vmatpush1.msra.mxu0 0.0
      %433 = vmatprep.subr.mxu0 0.0
      %434 = vmatpush1.msra.mxu0 0.0
      %435 = vmatprep.subr.mxu0 0.0
      %436 = vmatpush1.msra.mxu0 0.0
      %437 = vmatprep.subr.mxu0 0.0
      %438 = vmatpush1.msra.mxu0 0.0
      %439 = vmatprep.subr.mxu0 0.0
      %440 = vmatpush1.msra.mxu0 0.0
      %441 = vmatprep.subr.mxu0 0.0
      %442 = vmatpush1.msra.mxu0 0.0
      %443 = vmatprep.subr.mxu0 0.0
      %444 = vmatpush1.msra.mxu0 0.0
      %445 = vmatprep.subr.mxu0 0.0
      %446 = vmatpush1.msra.mxu0 0.0
      %447 = vmatprep.subr.mxu0 0.0
      %448 = vmatpush1.msra.mxu0 0.0
      %449 = vmatprep.subr.mxu0 0.0
      %450 = vmatpush1.msra.mxu0 0.0
      %451 = vmatprep.subr.mxu0 0.0
      %452 = vmatpush1.msra.mxu0 0.0
      %453 = vmatprep.subr.mxu0 0.0
      %454 = vmatpush1.msra.mxu0 0.0
      %455 = vmatprep.subr.mxu0 0.0
      %456 = vmatpush1.msra.mxu0 0.0
      %457 = vmatprep.subr.mxu0 0.0
      %458 = vmatpush1.msra.mxu0 0.0
      %459 = vmatprep.mubr.f32.mxu0 0.0
      %460 = vmatmul.mubr.f32.gmra.mrb[0].mxu0 %v386
      %v461 = vpop.f32.mrb[0].mxu0
      %v462 = vadd.f32 0.0, %v461
      %v463 = vpop.f32.mrb[0].mxu0
      %464 = vmatprep.mubr.f32.mxu0 0.0
      %465 = vmatmul.mubr.f32.gmra.mrb[0].mxu0 %v389
      %v466 = vpop.f32.mrb[0].mxu0
      %v467 = vadd.f32 0.0, %v466
      %v468 = vpop.f32.mrb[0].mxu0
      %469 = vdwg.mxu0
      %v470 = vld [vmem:[%s1] sm:$0x1]
      %v471 = vmul.f32 %v201, %v462
      %v472 = vmul.f32 %v202, %v467
      %v474 = vlaneseq
      %v475 = vshrl.u32 %v474, 7
      %v476 = vsub.s32 0, %v475
      %v477 = vrot.slane %v470, %v476
      %v479 = vmul.f32 %v471, %v477
      %v480 = vmul.f32 %v472, %v477
      %481 = vst [vmem:[%s199] sm:$0xff] %v479
      %482 = vst [vmem:[%s199 + $0x8] sm:$0xff] %v480
      %s483 = smul.u32 2, %s15
      %p484 = scmp.lt.s32.totalorder %s483, 3
      %s485 = scalar_select %p484, %s483, 3
      %s486 = smul.addr %s485, 8
      %s487 = scalar_lea.vmem %s4, %s486
      // Predicated region
      $region37: #{biasfree_layernorm.1} parent=35 // pred_check
        %p488 = pneg %p122
      $region38: #{biasfree_layernorm.1} parent=35 // pred_check_branch
        %490 = sbr.rel (%p488) target = $region40
      $region39: #{biasfree_layernorm.1} parent=35 // pred_region
        %s491 = smul.u32 2, %s15
      $region40: #{biasfree_layernorm.1} parent=35 // pred_fallthru
        _
    $region36: #{biasfree_layernorm.1} parent=5 // pred_fallthru
      _
    %p492 = scmp.le.s32.totalorder 2, %s10
    // Predicated region
    $region41: #{biasfree_layernorm.1} parent=5 // pred_check
      %p493 = pneg %p492
    $region42: #{biasfree_layernorm.1} parent=5 // pred_check_branch
      %495 = sbr.rel (%p493) target = $region44
    $region43: #{biasfree_layernorm.1} parent=5 // pred_region
      %s496 = ssub.s32 %s10, 2
      // Predicated region
      $region45: #{biasfree_layernorm.1} parent=43 // pred_check
        %p497 = pneg %p128
      $region46: #{biasfree_layernorm.1} parent=43 // pred_check_branch
        %499 = sbr.rel (%p497) target = $region48
      $region47: #{biasfree_layernorm.1} parent=43 // pred_region
        %s500 = smul.u32 2, %s16
        %p501 = scmp.lt.s32.totalorder %s500, 3
        %s502 = scalar_select %p501, %s500, 3
        %s503 = smul.addr %s502, 8
        %s504 = scalar_lea.vmem %s4, %s503
      $region48: #{biasfree_layernorm.1} parent=43 // pred_fallthru
        _
    $region44: #{biasfree_layernorm.1} parent=5 // pred_fallthru
      _
  $region6: #{biasfree_layernorm.1} parent=0 // loop_footer
    %s14 = sadd.s32 1, %s10
  $region7: #{biasfree_layernorm.1} parent=0 // loop_footer_branch
    %9 = sbr.rel target = $region3
  $region8: #{biasfree_layernorm.1} parent=0 // loop_exit
    _

</llo_original>
